<compile_context>
chip_gen: v7x
topology: tpu7x:2x2x1
jax: 0.10.0
libtpu: 0.0.40
codegen_flags: <defaults>
</compile_context>

<pallas_src>
from functools import partial

import jax
import jax.numpy as jnp
from jax.experimental import pallas as pl
from jax.experimental.pallas import tpu as pltpu


def _round_up(n: int, m: int) -> int:
    return ((n + m - 1) // m) * m


def mlp_kernel(x_ref, w1_ref, w2_ref, o_ref):
    # x:  [B_TILE, D_pad]   w1: [D_pad, H_pad]   w2: [H_pad, C_pad]   o: [B_TILE, C_pad]
    # Biases are already folded into w1/w2 (see prepare_params), so the whole
    # forward is two MXU pushes plus one VPU max.
    h = jnp.dot(x_ref[...], w1_ref[...], preferred_element_type=jnp.float32)
    h = jnp.maximum(h, 0.0)  # ReLU kept in f32 (v5e VPU has no bf16 path)
    out = jnp.dot(h.astype(w2_ref.dtype), w2_ref[...],
                  preferred_element_type=jnp.float32)
    o_ref[...] = out.astype(o_ref.dtype)


def prepare_params(w1, b1, w2, b2, compute_dtype=jnp.float32):
    """Fold biases into the weights and zero-pad everything to 128-lane shapes.

    w1: [D_in, H] (x @ w1 layout), b1: [H], w2: [H, C], b2: [C].
    Returns:
      w1_aug: [D_pad, H_pad]  (row D_in holds b1; w1_aug[D_in, H] == 1 drives a
                               constant-1 hidden lane used to apply b2)
      w2_aug: [H_pad, C_pad]  (row H holds b2; padded rows/cols are exactly 0)
    """
    d_in, h = w1.shape
    _, c = w2.shape
    d_pad = _round_up(d_in + 1, 128)   # +1 for the ones-column of x
    h_pad = _round_up(h + 1, 128)      # +1 for the constant-1 hidden lane
    c_pad = _round_up(c, 128)          # lane-dense output

    w1_aug = jnp.zeros((d_pad, h_pad), jnp.float32)
    w1_aug = w1_aug.at[:d_in, :h].set(w1)
    w1_aug = w1_aug.at[d_in, :h].set(b1)   # bias row (hit by x's ones column)
    w1_aug = w1_aug.at[d_in, h].set(1.0)   # constant-1 hidden lane (ReLU(1)=1)

    w2_aug = jnp.zeros((h_pad, c_pad), jnp.float32)
    w2_aug = w2_aug.at[:h, :c].set(w2)
    w2_aug = w2_aug.at[h, :c].set(b2)      # bias row (hit by constant-1 lane)

    return w1_aug.astype(compute_dtype), w2_aug.astype(compute_dtype)


@partial(jax.jit, static_argnames=("num_classes",))
def resume_class_forward(x, w1_aug, w2_aug, *, num_classes):
    """x: [B, D_in]; w1_aug: [D_pad, H_pad]; w2_aug: [H_pad, C_pad]."""
    b, d_in = x.shape
    d_pad, h_pad = w1_aug.shape
    h_pad2, c_pad = w2_aug.shape
    assert h_pad == h_pad2 and d_in + 1 <= d_pad

    # Batch tile: tiny batches stay a single tile; large batches use a 256-row
    # tile so the MXU M dimension is filled (v6e/v7x) while comfortably fitting
    # v7x's 64 MiB VMEM with double-buffered x/out tiles + resident weights.
    b_tile = 256 if b >= 256 else max(8, _round_up(b, 8))
    b_pad = _round_up(b, b_tile)
    grid = (b_pad // b_tile,)

    cdt = w1_aug.dtype
    # Append the constant-1 column (activates the bias row of w1_aug), then
    # zero-pad to the lane-aligned kernel shape.
    x_aug = jnp.concatenate([x.astype(cdt), jnp.ones((b, 1), cdt)], axis=1)
    x_aug = jnp.pad(x_aug, ((0, b_pad - b), (0, d_pad - (d_in + 1))))

    itemsize = jnp.dtype(cdt).itemsize
    cost = pl.CostEstimate(
        flops=2 * b_pad * (d_pad * h_pad + h_pad * c_pad),
        transcendentals=0,
        bytes_accessed=(x_aug.size + w1_aug.size + w2_aug.size) * itemsize
        + b_pad * c_pad * 4,
    )

    out = pl.pallas_call(
        mlp_kernel,
        out_shape=jax.ShapeDtypeStruct((b_pad, c_pad), jnp.float32),
        grid=grid,
        in_specs=[
            pl.BlockSpec((b_tile, d_pad), lambda i: (i, 0)),
            pl.BlockSpec((d_pad, h_pad), lambda i: (0, 0)),  # weights resident
            pl.BlockSpec((h_pad, c_pad), lambda i: (0, 0)),  # weights resident
        ],
        out_specs=pl.BlockSpec((b_tile, c_pad), lambda i: (i, 0)),
        compiler_params=pltpu.CompilerParams(
            dimension_semantics=("parallel",)),  # shard batch over v7x's 2 TCs
        cost_estimate=cost,
    )(x_aug, w1_aug, w2_aug)

    # Slice away batch padding and the zero-padded class lanes.
    return out[:b, :num_classes]


if __name__ == "__main__":
    input_size, hidden_size, num_classes = 100, 50, 2
    batch = 8

    key = jax.random.PRNGKey(0)
    k_x, k_w1, k_b1, k_w2, k_b2 = jax.random.split(key, 5)

    x = jax.random.normal(k_x, (batch, input_size), dtype=jnp.float32)

    # PyTorch-style uniform init, bounds 1/sqrt(fan_in); weights already in
    # [in_features, out_features] layout (i.e. nn.Linear weight transposed).
    bound1 = 1.0 / (input_size ** 0.5)
    w1 = jax.random.uniform(k_w1, (input_size, hidden_size), jnp.float32, -bound1, bound1)
    b1 = jax.random.uniform(k_b1, (hidden_size,), jnp.float32, -bound1, bound1)
    bound2 = 1.0 / (hidden_size ** 0.5)
    w2 = jax.random.uniform(k_w2, (hidden_size, num_classes), jnp.float32, -bound2, bound2)
    b2 = jax.random.uniform(k_b2, (num_classes,), jnp.float32, -bound2, bound2)

    # One-time parameter prep: fold biases, zero-pad to 128 lanes.
    # (Use compute_dtype=jnp.bfloat16 on v6e/v7x for throughput; loosen the
    #  tolerance below to ~1e-2 in that case.)
    w1_aug, w2_aug = prepare_params(w1, b1, w2, b2, compute_dtype=jnp.float32)

    out = resume_class_forward(x, w1_aug, w2_aug, num_classes=num_classes)
    out = jax.block_until_ready(out)

    # Pure-JAX reference (same math as fc1 -> ReLU -> fc2), high precision.
    hp = jax.lax.Precision.HIGHEST
    ref = jnp.maximum(jnp.dot(x, w1, precision=hp) + b1, 0.0)
    ref = jnp.dot(ref, w2, precision=hp) + b2

    assert out.shape == (batch, num_classes)
    assert jnp.allclose(out, ref, atol=1e-4, rtol=1e-4), "mismatch vs reference"

    print("KERNEL_OK")
</pallas_src>

<mosaic_0001>
module attributes {stable_mosaic.version = 11 : i64} {
  func.func @mlp_kernel(%arg0: i32, %arg1: memref<8x128xf32, #tpu.memory_space<vmem>>, %arg2: memref<128x128xf32, #tpu.memory_space<vmem>>, %arg3: memref<128x128xf32, #tpu.memory_space<vmem>>, %arg4: memref<8x128xf32, #tpu.memory_space<vmem>>) attributes {dimension_semantics = [#tpu.dimension_semantics<parallel>], iteration_bounds = array<i64: 1>, scalar_prefetch = 0 : i64, scratch_operands = 0 : i64, tpu.core_type = #tpu.core_type<tc>, window_params = [{transform_indices = @transform_0, window_bounds = array<i64: 8, 128>}, {pipeline_mode = #tpu.pipeline_mode<synchronous>, transform_indices = @transform_1, window_bounds = array<i64: 128, 128>}, {pipeline_mode = #tpu.pipeline_mode<synchronous>, transform_indices = @transform_2, window_bounds = array<i64: 128, 128>}, {transform_indices = @transform_3, window_bounds = array<i64: 8, 128>}]} {
    %c0 = arith.constant 0 : index
    %c0_0 = arith.constant 0 : index
    %0 = vector.load %arg1[%c0, %c0_0] : memref<8x128xf32, #tpu.memory_space<vmem>>, vector<8x128xf32>
    %c0_1 = arith.constant 0 : index
    %c0_2 = arith.constant 0 : index
    %1 = vector.load %arg2[%c0_1, %c0_2] : memref<128x128xf32, #tpu.memory_space<vmem>>, vector<128x128xf32>
    %cst = arith.constant dense<0.000000e+00> : vector<8x128xf32>
    %2 = tpu.matmul %0, %1, %cst {dimension_numbers = #tpu.dot_dimension_numbers<[1], [0], [0], [1], [0, 0, 1, 1], [], []>} : vector<8x128xf32>, vector<128x128xf32>, vector<8x128xf32> -> vector<8x128xf32>
    %cst_3 = arith.constant 0.000000e+00 : f32
    %3 = vector.broadcast %cst_3 : f32 to vector<8x128xf32>
    %4 = arith.maximumf %2, %3 : vector<8x128xf32>
    %c0_4 = arith.constant 0 : index
    %c0_5 = arith.constant 0 : index
    %5 = vector.load %arg3[%c0_4, %c0_5] : memref<128x128xf32, #tpu.memory_space<vmem>>, vector<128x128xf32>
    %cst_6 = arith.constant dense<0.000000e+00> : vector<8x128xf32>
    %6 = tpu.matmul %4, %5, %cst_6 {dimension_numbers = #tpu.dot_dimension_numbers<[1], [0], [0], [1], [0, 0, 1, 1], [], []>} : vector<8x128xf32>, vector<128x128xf32>, vector<8x128xf32> -> vector<8x128xf32>
    %c0_7 = arith.constant 0 : index
    %c0_8 = arith.constant 0 : index
    %7 = vector.load %arg4[%c0_7, %c0_8] : memref<8x128xf32, #tpu.memory_space<vmem>>, vector<8x128xf32>
    tpu.vector_store %arg4[%c0_7, %c0_8], %6 {strides = array<i32>} : memref<8x128xf32, #tpu.memory_space<vmem>>, vector<8x128xf32>,
    return
  }
  func.func @transform_0(%arg0: i32) -> (i32, i32) {
    %c0_i32 = arith.constant 0 : i32
    %c0_i32_0 = arith.constant 0 : i32
    return %arg0, %c0_i32 : i32, i32
  }
  func.func @transform_1(%arg0: i32) -> (i32, i32) {
    %c0_i32 = arith.constant 0 : i32
    %c0_i32_0 = arith.constant 0 : i32
    %c0_i32_1 = arith.constant 0 : i32
    return %c0_i32, %c0_i32_0 : i32, i32
  }
  func.func @transform_2(%arg0: i32) -> (i32, i32) {
    %c0_i32 = arith.constant 0 : i32
    %c0_i32_0 = arith.constant 0 : i32
    %c0_i32_1 = arith.constant 0 : i32
    return %c0_i32, %c0_i32_0 : i32, i32
  }
  func.func @transform_3(%arg0: i32) -> (i32, i32) {
    %c0_i32 = arith.constant 0 : i32
    %c0_i32_0 = arith.constant 0 : i32
    return %arg0, %c0_i32 : i32, i32
  }
}

</mosaic_0001>

<llo_original>
// kernel: resume_class_forward.1
$region0: #{resume_class_forward.1}
  #allocation0 [shape = 'u32[]', space=smem, size = 0x4, offset = 0x4, fixed_abs, tag = 'smem constant byte address 0x4 - core index']
  #allocation1 [shape = 'u32[144,128]{1,0:T(1,128)}', space=vmem, size = 0x12000, scoped, tag = 'internal scratch']
  %s0 = inlined_call_operand.vmem [shape: f32[8,128], index: 0, kind: input, shape index: {}]
  %s1 = inlined_call_operand.hbm [shape: f32[128,128], index: 1, kind: input, shape index: {}]
  %s2 = inlined_call_operand.hbm [shape: f32[128,128], index: 2, kind: input, shape index: {}]
  %s3 = inlined_call_operand.vmem [shape: f32[8,128], index: 3, kind: output, shape index: {}]
  %s4 = sld [smem:[#allocation0]]
  $region30: #{resume_class_forward.1} parent=0
    _
  %s6 = ssub.s32 1, %s4
  %s7 = scalar_select 0, %s6, %s4
  $region1: #{resume_class_forward.1} parent=0
    #allocation2 [shape = 'u8[65536]{0}', space=vmem, size = 0x10000, scoped, tag = 'input window, operand 1, single buffered']
    #allocation3 [shape = 's32[1]{0}', space=sflag, size = 0x4, scoped, tag = 'scoped memory for resume_class_forward.1']
    #allocation4 [shape = 'u8[65536]{0}', space=vmem, size = 0x10000, scoped, tag = 'input window, operand 2, single buffered']
    #allocation5 [shape = 's32[1]{0}', space=sflag, size = 0x4, scoped, tag = 'scoped memory for resume_class_forward.1']
    %8 = vsyncpa [#allocation3], 0
    %9 = vsyncpa [#allocation5], 0
    // Predicated region
    $region2: #{resume_class_forward.1} parent=1 // pred_check
      _
    $region3: #{resume_class_forward.1} parent=1 // pred_check_branch
      %11 = sbr.rel (0) target = $region5
    $region4: #{resume_class_forward.1} parent=1 // pred_region
      _
    $region5: #{resume_class_forward.1} parent=1 // pred_fallthru
      _
    // Predicated region
    $region6: #{resume_class_forward.1} parent=1 // pred_check
      _
    $region7: #{resume_class_forward.1} parent=1 // pred_check_branch
      %13 = sbr.rel (0) target = $region9
    $region8: #{resume_class_forward.1} parent=1 // pred_region
      %s15 = ssub.s32 2048, 2048
      %16 = vsyncadd [#allocation3], %s15
      %s17 = sshll.u32 [#allocation2], 4
      %s18 = int_to_ptr.vmem [resolvable:$true] %s17
      %23 = dma.hbm_to_vmem [thread:$0]  %s1, 2048, %s18, [#allocation3], 128, 128, 8
    $region9: #{resume_class_forward.1} parent=1 // pred_fallthru
      _
    // Predicated region
    $region10: #{resume_class_forward.1} parent=1 // pred_check
      _
    $region11: #{resume_class_forward.1} parent=1 // pred_check_branch
      %25 = sbr.rel (0) target = $region13
    $region12: #{resume_class_forward.1} parent=1 // pred_region
      %s27 = ssub.s32 2048, 2048
      %28 = vsyncadd [#allocation5], %s27
      %s29 = sshll.u32 [#allocation4], 4
      %s30 = int_to_ptr.vmem [resolvable:$true] %s29
      %35 = dma.hbm_to_vmem [thread:$0]  %s2, 2048, %s30, [#allocation5], 128, 128, 8
    $region13: #{resume_class_forward.1} parent=1 // pred_fallthru
      _
    // Predicated region
    $region14: #{resume_class_forward.1} parent=1 // pred_check
      _
    $region15: #{resume_class_forward.1} parent=1 // pred_check_branch
      %37 = sbr.rel (0) target = $region17
    $region16: #{resume_class_forward.1} parent=1 // pred_region
      %38 = dma.done [#allocation3], 2048
    $region17: #{resume_class_forward.1} parent=1 // pred_fallthru
      _
    // Predicated region
    $region18: #{resume_class_forward.1} parent=1 // pred_check
      _
    $region19: #{resume_class_forward.1} parent=1 // pred_check_branch
      %40 = sbr.rel (0) target = $region21
    $region20: #{resume_class_forward.1} parent=1 // pred_region
      %41 = dma.done [#allocation5], 2048
    $region21: #{resume_class_forward.1} parent=1 // pred_fallthru
      _
    %v42 = vld [vmem:[%s0] sm:$0xff]
    %v43 = vld [vmem:[#allocation2] sm:$0xff]
    %v44 = vld [vmem:[#allocation2 + $0x8] sm:$0xff]
    %v45 = vld [vmem:[#allocation2 + $0x10] sm:$0xff]
    %v46 = vld [vmem:[#allocation2 + $0x18] sm:$0xff]
    %v47 = vld [vmem:[#allocation2 + $0x20] sm:$0xff]
    %v48 = vld [vmem:[#allocation2 + $0x28] sm:$0xff]
    %v49 = vld [vmem:[#allocation2 + $0x30] sm:$0xff]
    %v50 = vld [vmem:[#allocation2 + $0x38] sm:$0xff]
    %v51 = vld [vmem:[#allocation2 + $0x40] sm:$0xff]
    %v52 = vld [vmem:[#allocation2 + $0x48] sm:$0xff]
    %v53 = vld [vmem:[#allocation2 + $0x50] sm:$0xff]
    %v54 = vld [vmem:[#allocation2 + $0x58] sm:$0xff]
    %v55 = vld [vmem:[#allocation2 + $0x60] sm:$0xff]
    %v56 = vld [vmem:[#allocation2 + $0x68] sm:$0xff]
    %v57 = vld [vmem:[#allocation2 + $0x70] sm:$0xff]
    %v58 = vld [vmem:[#allocation2 + $0x78] sm:$0xff]
    %59 = vmatprep.subr.mxu0 0.0
    %60 = vmatpush1.msra.mxu0 %v43
    %61 = vmatprep.subr.mxu0 0.0
    %62 = vmatpush1.msra.mxu0 %v44
    %63 = vmatprep.subr.mxu0 0.0
    %64 = vmatpush1.msra.mxu0 %v45
    %65 = vmatprep.subr.mxu0 0.0
    %66 = vmatpush1.msra.mxu0 %v46
    %67 = vmatprep.subr.mxu0 0.0
    %68 = vmatpush1.msra.mxu0 %v47
    %69 = vmatprep.subr.mxu0 0.0
    %70 = vmatpush1.msra.mxu0 %v48
    %71 = vmatprep.subr.mxu0 0.0
    %72 = vmatpush1.msra.mxu0 %v49
    %73 = vmatprep.subr.mxu0 0.0
    %74 = vmatpush1.msra.mxu0 %v50
    %75 = vmatprep.subr.mxu0 0.0
    %76 = vmatpush1.msra.mxu0 %v51
    %77 = vmatprep.subr.mxu0 0.0
    %78 = vmatpush1.msra.mxu0 %v52
    %79 = vmatprep.subr.mxu0 0.0
    %80 = vmatpush1.msra.mxu0 %v53
    %81 = vmatprep.subr.mxu0 0.0
    %82 = vmatpush1.msra.mxu0 %v54
    %83 = vmatprep.subr.mxu0 0.0
    %84 = vmatpush1.msra.mxu0 %v55
    %85 = vmatprep.subr.mxu0 0.0
    %86 = vmatpush1.msra.mxu0 %v56
    %87 = vmatprep.subr.mxu0 0.0
    %88 = vmatpush1.msra.mxu0 %v57
    %89 = vmatprep.subr.mxu0 0.0
    %90 = vmatpush1.msra.mxu0 %v58
    %91 = vmatprep.subr.mxu0 0.0
    %92 = vmatpush1.msra.mxu0 0.0
    %93 = vmatprep.subr.mxu0 0.0
    %94 = vmatpush1.msra.mxu0 0.0
    %95 = vmatprep.subr.mxu0 0.0
    %96 = vmatpush1.msra.mxu0 0.0
    %97 = vmatprep.subr.mxu0 0.0
    %98 = vmatpush1.msra.mxu0 0.0
    %99 = vmatprep.subr.mxu0 0.0
    %100 = vmatpush1.msra.mxu0 0.0
    %101 = vmatprep.subr.mxu0 0.0
    %102 = vmatpush1.msra.mxu0 0.0
    %103 = vmatprep.subr.mxu0 0.0
    %104 = vmatpush1.msra.mxu0 0.0
    %105 = vmatprep.subr.mxu0 0.0
    %106 = vmatpush1.msra.mxu0 0.0
    %107 = vmatprep.subr.mxu0 0.0
    %108 = vmatpush1.msra.mxu0 0.0
    %109 = vmatprep.subr.mxu0 0.0
    %110 = vmatpush1.msra.mxu0 0.0
    %111 = vmatprep.subr.mxu0 0.0
    %112 = vmatpush1.msra.mxu0 0.0
    %113 = vmatprep.subr.mxu0 0.0
    %114 = vmatpush1.msra.mxu0 0.0
    %115 = vmatprep.subr.mxu0 0.0
    %116 = vmatpush1.msra.mxu0 0.0
    %117 = vmatprep.subr.mxu0 0.0
    %118 = vmatpush1.msra.mxu0 0.0
    %119 = vmatprep.subr.mxu0 0.0
    %120 = vmatpush1.msra.mxu0 0.0
    %121 = vmatprep.subr.mxu0 0.0
    %122 = vmatpush1.msra.mxu0 0.0
    %123 = vmatprep.mubr.f32.mxu0 0.0
    %124 = vmatmul.mubr.f32.gmra.mrb[0].mxu0 %v42
    %v125 = vpop.f32.mrb[0].mxu0
    %v126 = vadd.f32 0.0, %v125
    %v127 = vpop.f32.mrb[0].mxu0
    %128 = vdwg.mxu0
    %v129 = vmax.f32 %v126, 0.0
    %v130 = vld [vmem:[#allocation4] sm:$0xff]
    %v131 = vld [vmem:[#allocation4 + $0x8] sm:$0xff]
    %v132 = vld [vmem:[#allocation4 + $0x10] sm:$0xff]
    %v133 = vld [vmem:[#allocation4 + $0x18] sm:$0xff]
    %v134 = vld [vmem:[#allocation4 + $0x20] sm:$0xff]
    %v135 = vld [vmem:[#allocation4 + $0x28] sm:$0xff]
    %v136 = vld [vmem:[#allocation4 + $0x30] sm:$0xff]
    %v137 = vld [vmem:[#allocation4 + $0x38] sm:$0xff]
    %v138 = vld [vmem:[#allocation4 + $0x40] sm:$0xff]
    %v139 = vld [vmem:[#allocation4 + $0x48] sm:$0xff]
    %v140 = vld [vmem:[#allocation4 + $0x50] sm:$0xff]
    %v141 = vld [vmem:[#allocation4 + $0x58] sm:$0xff]
    %v142 = vld [vmem:[#allocation4 + $0x60] sm:$0xff]
    %v143 = vld [vmem:[#allocation4 + $0x68] sm:$0xff]
    %v144 = vld [vmem:[#allocation4 + $0x70] sm:$0xff]
    %v145 = vld [vmem:[#allocation4 + $0x78] sm:$0xff]
    %146 = vmatprep.subr.mxu0 0.0
    %147 = vmatpush1.msra.mxu0 %v130
    %148 = vmatprep.subr.mxu0 0.0
    %149 = vmatpush1.msra.mxu0 %v131
    %150 = vmatprep.subr.mxu0 0.0
    %151 = vmatpush1.msra.mxu0 %v132
    %152 = vmatprep.subr.mxu0 0.0
    %153 = vmatpush1.msra.mxu0 %v133
    %154 = vmatprep.subr.mxu0 0.0
    %155 = vmatpush1.msra.mxu0 %v134
    %156 = vmatprep.subr.mxu0 0.0
    %157 = vmatpush1.msra.mxu0 %v135
    %158 = vmatprep.subr.mxu0 0.0
    %159 = vmatpush1.msra.mxu0 %v136
    %160 = vmatprep.subr.mxu0 0.0
    %161 = vmatpush1.msra.mxu0 %v137
    %162 = vmatprep.subr.mxu0 0.0
    %163 = vmatpush1.msra.mxu0 %v138
    %164 = vmatprep.subr.mxu0 0.0
    %165 = vmatpush1.msra.mxu0 %v139
    %166 = vmatprep.subr.mxu0 0.0
    %167 = vmatpush1.msra.mxu0 %v140
    %168 = vmatprep.subr.mxu0 0.0
    %169 = vmatpush1.msra.mxu0 %v141
    %170 = vmatprep.subr.mxu0 0.0
    %171 = vmatpush1.msra.mxu0 %v142
    %172 = vmatprep.subr.mxu0 0.0
    %173 = vmatpush1.msra.mxu0 %v143
    %174 = vmatprep.subr.mxu0 0.0
    %175 = vmatpush1.msra.mxu0 %v144
    %176 = vmatprep.subr.mxu0 0.0
    %177 = vmatpush1.msra.mxu0 %v145
    %178 = vmatprep.subr.mxu0 0.0
    %179 = vmatpush1.msra.mxu0 0.0
    %180 = vmatprep.subr.mxu0 0.0
    %181 = vmatpush1.msra.mxu0 0.0
    %182 = vmatprep.subr.mxu0 0.0
    %183 = vmatpush1.msra.mxu0 0.0
    %184 = vmatprep.subr.mxu0 0.0
    %185 = vmatpush1.msra.mxu0 0.0
    %186 = vmatprep.subr.mxu0 0.0
    %187 = vmatpush1.msra.mxu0 0.0
    %188 = vmatprep.subr.mxu0 0.0
    %189 = vmatpush1.msra.mxu0 0.0
    %190 = vmatprep.subr.mxu0 0.0
    %191 = vmatpush1.msra.mxu0 0.0
    %192 = vmatprep.subr.mxu0 0.0
    %193 = vmatpush1.msra.mxu0 0.0
    %194 = vmatprep.subr.mxu0 0.0
    %195 = vmatpush1.msra.mxu0 0.0
    %196 = vmatprep.subr.mxu0 0.0
    %197 = vmatpush1.msra.mxu0 0.0
    %198 = vmatprep.subr.mxu0 0.0
    %199 = vmatpush1.msra.mxu0 0.0
    %200 = vmatprep.subr.mxu0 0.0
    %201 = vmatpush1.msra.mxu0 0.0
    %202 = vmatprep.subr.mxu0 0.0
    %203 = vmatpush1.msra.mxu0 0.0
    %204 = vmatprep.subr.mxu0 0.0
    %205 = vmatpush1.msra.mxu0 0.0
    %206 = vmatprep.subr.mxu0 0.0
    %207 = vmatpush1.msra.mxu0 0.0
    %208 = vmatprep.subr.mxu0 0.0
    %209 = vmatpush1.msra.mxu0 0.0
    %210 = vmatprep.mubr.f32.mxu0 0.0
    %211 = vmatmul.mubr.f32.gmra.mrb[0].mxu0 %v129
    %v212 = vpop.f32.mrb[0].mxu0
    %v213 = vadd.f32 0.0, %v212
    %v214 = vpop.f32.mrb[0].mxu0
    %215 = vdwg.mxu0
    %216 = vst [vmem:[%s3] sm:$0xff] %v213
    // Predicated region
    $region22: #{resume_class_forward.1} parent=1 // pred_check
      _
    $region23: #{resume_class_forward.1} parent=1 // pred_check_branch
      %218 = sbr.rel (0) target = $region25
    $region24: #{resume_class_forward.1} parent=1 // pred_region
      _
    $region25: #{resume_class_forward.1} parent=1 // pred_fallthru
      _
    // Predicated region
    $region26: #{resume_class_forward.1} parent=1 // pred_check
      _
    $region27: #{resume_class_forward.1} parent=1 // pred_check_branch
      %220 = sbr.rel (0) target = $region29
    $region28: #{resume_class_forward.1} parent=1 // pred_region
      _
    $region29: #{resume_class_forward.1} parent=1 // pred_fallthru
      _
    %221 = vsyncpa [#allocation3], 1
    %222 = vsyncpa [#allocation5], 1

</llo_original>
